<compile_context>
chip_gen: v7x
topology: tpu7x:2x2x1
jax: 0.10.0
libtpu: 0.0.40
codegen_flags: <defaults>
</compile_context>

<pallas_src>
import jax
import jax.numpy as jnp
from jax import lax
from jax.experimental import pallas as pl
from jax.experimental.pallas import tpu as pltpu

EOS = 1e-10

# module hyper-parameters (deterministic, set in-script)
ALPHA_MODEL = 0.3          # self.alpha (used in weight_to_adj)
ALPHA_COMB = 0.5           # default alpha of get_adj_2_edges
TEMPERATURE = 1.0
BIAS = 0.0 + 0.0001


# --------------------------------------------------------------------------- kernels
def _embed_kernel(x_ref, w_ref, b_ref, emb_ref):
    h = jnp.dot(x_ref[...], w_ref[...], preferred_element_type=jnp.float32) + b_ref[...]
    emb_ref[...] = jnp.maximum(h, 0.0).astype(emb_ref.dtype)


def _weights_kernel(emb_r_ref, emb_c_ref, msum_ref, mu_ref, gate_ref,
                    wlp_ref, dlp_ref, dhp_ref):
    j = pl.program_id(1)

    # degree accumulators live across the column axis; identity adds exactly 1 per row
    @pl.when(j == 0)
    def _():
        dlp_ref[...] = jnp.ones_like(dlp_ref)
        dhp_ref[...] = jnp.ones_like(dhp_ref)

    # sim[i, j] = <emb_i, emb_j>  (contract dim1-dim1, no transpose materialization)
    sim = lax.dot_general(emb_r_ref[...], emb_c_ref[...],
                          dimension_numbers=(((1,), (1,)), ((), ())),
                          preferred_element_type=jnp.float32)

    msum = msum_ref[...].astype(jnp.float32)   # m1 + m2 in {0,1,2} (edge multiplicity)
    mu = mu_ref[...].astype(jnp.float32)       # edges_2 = union edge mask

    # merge_edge_weights: weight adds once per edge list containing the edge
    merged = sim * msum

    # gumbel_sampling: sigmoid((log(eps) - log(1-eps) + merged) / T), noise precomputed
    lp = jax.nn.sigmoid((gate_ref[...] + merged) * (1.0 / TEMPERATURE))

    wlp = lp * mu                              # weights only live on union edges
    wlp_ref[...] = wlp

    # row degrees of (scatter(weights) + I); whp = (1 - lp) * mu == mu - wlp
    dlp_ref[...] += jnp.sum(wlp, axis=1, keepdims=True)
    dhp_ref[...] += jnp.sum(mu - wlp, axis=1, keepdims=True)


def _norm_kernel(wlp_ref, mu_ref, ilr_ref, ilc_ref, ihr_ref, ihc_ref,
                 adj_lp_ref, adj_hp_ref, whp_ref):
    tm, tn = wlp_ref.shape
    row0 = pl.program_id(0) * tm
    col0 = pl.program_id(1) * tn
    ri = lax.broadcasted_iota(jnp.int32, (tm, tn), 0) + row0
    ci = lax.broadcasted_iota(jnp.int32, (tm, tn), 1) + col0
    eye = (ri == ci).astype(jnp.float32)

    wlp = wlp_ref[...]
    mu = mu_ref[...].astype(jnp.float32)
    whp = mu - wlp                       # == (1 - lp) * mu ; saves an (N,N) read
    whp_ref[...] = whp

    # adj_lp = D^-1/2 (W_lp + I) D^-1/2
    adj_lp_ref[...] = ilr_ref[...] * (wlp + eye) * ilc_ref[...]

    # adj_hp = I - D^-1/2 (W_hp + I) D^-1/2 * mask * alpha
    adj_hp_n = ihr_ref[...] * (whp + eye) * ihc_ref[...]
    adj_hp_ref[...] = eye - adj_hp_n * mu * ALPHA_MODEL


# --------------------------------------------------------------------------- wrapper
def _round_up(x, m):
    return ((x + m - 1) // m) * m


def _pad2(a, rows, cols):
    r, c = a.shape
    if r == rows and c == cols:
        return a
    return jnp.pad(a, ((0, rows - r), (0, cols - c)))


def _pick_tile(n_pad, candidates):
    for c in candidates:
        if c <= n_pad and n_pad % c == 0:
            return c
    return n_pad


def graph_edge_separator_forward(features, adj, adj_two_order, w, b, noise_key):
    n, f = features.shape
    h = w.shape[1]
    # only the (N, N) arrays need lane-dense padding; f / h stay unpadded (full-dim blocks)
    n_pad = _round_up(n, 128)
    tm = _pick_tile(n_pad, (256, 128))
    tn = _pick_tile(n_pad, (1024, 512, 256, 128))
    gm, gn = n_pad // tm, n_pad // tn

    f32 = jnp.float32
    x_p = _pad2(features.astype(f32), n_pad, f)
    w_p = w.astype(f32)
    b_p = b.astype(f32).reshape(1, h)
    a1 = adj.astype(f32)
    a2 = adj_two_order.astype(f32)

    # int8 edge masks: m1 + m2 (edge multiplicity) and the exact union mask of the
    # (1-alpha)*adj + alpha*adj_two_order combination (edges_2 of get_adj_2_edges).
    msum = _pad2(((a1 != 0.0).astype(jnp.int8) + (a2 != 0.0).astype(jnp.int8)),
                 n_pad, n_pad)
    mu_i8 = _pad2((((1.0 - ALPHA_COMB) * a1 + ALPHA_COMB * a2) != 0.0).astype(jnp.int8),
                  n_pad, n_pad)

    # gumbel-logistic gate noise, precomputed host-side (portable across TPU/interpret)
    u = jax.random.uniform(noise_key, (n_pad, n_pad), dtype=f32)
    eps = (BIAS - (1.0 - BIAS)) * u + (1.0 - BIAS)
    gate = jnp.log(eps) - jnp.log(1.0 - eps)

    # per-step (double-buffered) VMEM footprint is tile-sized and N-independent
    k2_step = 2 * (tm * h * 2 + tn * h * 2 + 2 * tm * tn + 4 * tm * tn + 4 * tm * tn
                   + 8 * tm)
    k3_step = 2 * (5 * tm * tn + 12 * tm * tn + 8 * (tm + tn))
    vmem_limit = int(min(64 << 20, max(32 << 20, 3 * max(k2_step, k3_step))))
    cp1 = pltpu.CompilerParams(dimension_semantics=("parallel",))
    cp2 = pltpu.CompilerParams(dimension_semantics=("parallel", "arbitrary"),
                               vmem_limit_bytes=vmem_limit)
    cp3 = pltpu.CompilerParams(dimension_semantics=("parallel", "parallel"),
                               vmem_limit_bytes=vmem_limit)

    nn_f32 = jax.ShapeDtypeStruct((n_pad, n_pad), jnp.float32)
    n1_f32 = jax.ShapeDtypeStruct((n_pad, 1), jnp.float32)
    tile_nn = pl.BlockSpec((tm, tn), lambda i, j: (i, j))
    deg_spec = pl.BlockSpec((tm, 1), lambda i, j: (i, 0))

    # ---- 1) node embedding: emb = relu(X @ W + b), row-tiled, bf16 output ----
    emb = pl.pallas_call(
        _embed_kernel,
        out_shape=jax.ShapeDtypeStruct((n_pad, h), jnp.bfloat16),
        grid=(gm,),
        in_specs=[pl.BlockSpec((tm, f), lambda i: (i, 0)),
                  pl.BlockSpec((f, h), lambda i: (0, 0)),
                  pl.BlockSpec((1, h), lambda i: (0, 0))],
        out_specs=pl.BlockSpec((tm, h), lambda i: (i, 0)),
        compiler_params=cp1,
    )(x_p, w_p, b_p)

    # ---- 2) edge weights + gumbel sampling + column-accumulated row degrees ----
    wlp, d_lp, d_hp = pl.pallas_call(
        _weights_kernel,
        out_shape=(nn_f32, n1_f32, n1_f32),
        grid=(gm, gn),
        in_specs=[pl.BlockSpec((tm, h), lambda i, j: (i, 0)),   # emb row block
                  pl.BlockSpec((tn, h), lambda i, j: (j, 0)),   # emb col block
                  tile_nn,                                      # msum (int8)
                  tile_nn,                                      # mu   (int8)
                  tile_nn],                                     # gate noise (f32)
        out_specs=(tile_nn, deg_spec, deg_spec),
        compiler_params=cp2,
    )(emb, emb, msum, mu_i8, gate)

    # ---- 3) D^-1/2 factors: O(N) glue, exact normalize_adj formula 1/(sqrt(d)+EOS) ----
    inv_lp = 1.0 / (jnp.sqrt(d_lp) + EOS)                  # (n_pad, 1) row factors
    inv_hp = 1.0 / (jnp.sqrt(d_hp) + EOS)
    inv_lp_c = inv_lp.reshape(1, n_pad)                    # (1, n_pad) column factors
    inv_hp_c = inv_hp.reshape(1, n_pad)

    # ---- 4) symmetric normalization + high-pass assembly (whp recomputed here) ----
    adj_lp, adj_hp, whp = pl.pallas_call(
        _norm_kernel,
        out_shape=(nn_f32, nn_f32, nn_f32),
        grid=(gm, gn),
        in_specs=[tile_nn, tile_nn,
                  pl.BlockSpec((tm, 1), lambda i, j: (i, 0)),
                  pl.BlockSpec((1, tn), lambda i, j: (0, j)),
                  pl.BlockSpec((tm, 1), lambda i, j: (i, 0)),
                  pl.BlockSpec((1, tn), lambda i, j: (0, j))],
        out_specs=(tile_nn, tile_nn, tile_nn),
        compiler_params=cp3,
    )(wlp, mu_i8, inv_lp, inv_lp_c, inv_hp, inv_hp_c)

    sl = (slice(0, n), slice(0, n))
    edges_2_mask = mu_i8[sl].astype(jnp.float32)
    return adj_lp[sl], adj_hp[sl], wlp[sl], whp[sl], edges_2_mask


# --------------------------------------------------------------------------- demo
if __name__ == "__main__":
    # small shapes consistent with the module
    NNODES, INPUT_DIM, HIDDEN_DIM = 64, 16, 32

    key = jax.random.PRNGKey(0)
    k_feat, k_adj, k_w, k_b, k_noise = jax.random.split(key, 5)

    features = jax.random.normal(k_feat, (NNODES, INPUT_DIM), dtype=jnp.float32)

    # deterministic symmetric binary adjacency + its (binarized) two-hop adjacency
    a = (jax.random.uniform(k_adj, (NNODES, NNODES)) < 0.08).astype(jnp.float32)
    adj = jnp.clip(a + a.T, 0.0, 1.0)
    adj_two_order = (jnp.dot(adj, adj) > 0).astype(jnp.float32)

    # nn.Linear(input_dim, hidden_dim) parameters, deterministic init
    w = jax.random.normal(k_w, (INPUT_DIM, HIDDEN_DIM), dtype=jnp.float32) * 0.1
    b = jax.random.normal(k_b, (1, HIDDEN_DIM), dtype=jnp.float32) * 0.01

    outs = graph_edge_separator_forward(features, adj, adj_two_order, w, b, k_noise)
    outs = jax.block_until_ready(outs)

    adj_lp, adj_hp, weights_lp, weights_hp, edges_2_mask = outs
    assert all(bool(jnp.all(jnp.isfinite(o))) for o in outs)
    assert adj_lp.shape == (NNODES, NNODES) and adj_hp.shape == (NNODES, NNODES)
    assert weights_lp.shape == (NNODES, NNODES)
    assert weights_hp.shape == (NNODES, NNODES)
    assert edges_2_mask.shape == (NNODES, NNODES)
    # weights_lp + weights_hp == union-edge mask (lp + (1-lp) on edges, 0 off edges)
    assert bool(jnp.allclose(weights_lp + weights_hp, edges_2_mask, atol=1e-5))

    print("KERNEL_OK")
</pallas_src>

<mosaic_0001>
module attributes {stable_mosaic.version = 11 : i64} {
  func.func @_embed_kernel(%arg0: i32, %arg1: memref<128x16xf32, #tpu.memory_space<vmem>>, %arg2: memref<16x32xf32, #tpu.memory_space<vmem>>, %arg3: memref<1x32xf32, #tpu.memory_space<vmem>>, %arg4: memref<128x32xbf16, #tpu.memory_space<vmem>>) attributes {dimension_semantics = [#tpu.dimension_semantics<parallel>], iteration_bounds = array<i64: 1>, scalar_prefetch = 0 : i64, scratch_operands = 0 : i64, tpu.core_type = #tpu.core_type<tc>, window_params = [{transform_indices = @transform_0, window_bounds = array<i64: 128, 16>}, {pipeline_mode = #tpu.pipeline_mode<synchronous>, transform_indices = @transform_1, window_bounds = array<i64: 16, 32>}, {pipeline_mode = #tpu.pipeline_mode<synchronous>, transform_indices = @transform_2, window_bounds = array<i64: 1, 32>}, {transform_indices = @transform_3, window_bounds = array<i64: 128, 32>}]} {
    %c0 = arith.constant 0 : index
    %c0_0 = arith.constant 0 : index
    %0 = vector.load %arg1[%c0, %c0_0] : memref<128x16xf32, #tpu.memory_space<vmem>>, vector<128x16xf32>
    %c0_1 = arith.constant 0 : index
    %c0_2 = arith.constant 0 : index
    %1 = vector.load %arg2[%c0_1, %c0_2] : memref<16x32xf32, #tpu.memory_space<vmem>>, vector<16x32xf32>
    %cst = arith.constant dense<0.000000e+00> : vector<128x32xf32>
    %2 = tpu.matmul %0, %1, %cst {dimension_numbers = #tpu.dot_dimension_numbers<[1], [0], [0], [1], [0, 0, 1, 1], [], []>} : vector<128x16xf32>, vector<16x32xf32>, vector<128x32xf32> -> vector<128x32xf32>
    %c0_3 = arith.constant 0 : index
    %c0_4 = arith.constant 0 : index
    %3 = vector.load %arg3[%c0_3, %c0_4] : memref<1x32xf32, #tpu.memory_space<vmem>>, vector<1x32xf32>
    %4 = vector.broadcast %3 : vector<1x32xf32> to vector<128x32xf32>
    %5 = arith.addf %2, %4 : vector<128x32xf32>
    %cst_5 = arith.constant 0.000000e+00 : f32
    %6 = vector.broadcast %cst_5 : f32 to vector<128x32xf32>
    %7 = arith.maximumf %5, %6 : vector<128x32xf32>
    %8 = arith.truncf %7 : vector<128x32xf32> to vector<128x32xbf16>
    %c0_6 = arith.constant 0 : index
    %c0_7 = arith.constant 0 : index
    %9 = vector.load %arg4[%c0_6, %c0_7] : memref<128x32xbf16, #tpu.memory_space<vmem>>, vector<128x32xbf16>
    tpu.vector_store %arg4[%c0_6, %c0_7], %8 {strides = array<i32>} : memref<128x32xbf16, #tpu.memory_space<vmem>>, vector<128x32xbf16>,
    return
  }
  func.func @transform_0(%arg0: i32) -> (i32, i32) {
    %c0_i32 = arith.constant 0 : i32
    %c0_i32_0 = arith.constant 0 : i32
    return %arg0, %c0_i32 : i32, i32
  }
  func.func @transform_1(%arg0: i32) -> (i32, i32) {
    %c0_i32 = arith.constant 0 : i32
    %c0_i32_0 = arith.constant 0 : i32
    %c0_i32_1 = arith.constant 0 : i32
    return %c0_i32, %c0_i32_0 : i32, i32
  }
  func.func @transform_2(%arg0: i32) -> (i32, i32) {
    %c0_i32 = arith.constant 0 : i32
    %c0_i32_0 = arith.constant 0 : i32
    %c0_i32_1 = arith.constant 0 : i32
    return %c0_i32, %c0_i32_0 : i32, i32
  }
  func.func @transform_3(%arg0: i32) -> (i32, i32) {
    %c0_i32 = arith.constant 0 : i32
    %c0_i32_0 = arith.constant 0 : i32
    return %arg0, %c0_i32 : i32, i32
  }
}

</mosaic_0001>

<llo_original>
// kernel: tpu_custom_call.1
$region0: #{tpu_custom_call.1}
  #allocation0 [shape = 'u32[]', space=smem, size = 0x4, offset = 0x4, fixed_abs, tag = 'smem constant byte address 0x4 - core index']
  #allocation1 [shape = 'u32[144,128]{1,0:T(1,128)}', space=vmem, size = 0x12000, scoped, tag = 'internal scratch']
  %s0 = inlined_call_operand.vmem [shape: f32[128,16], index: 0, kind: input, shape index: {}]
  %s1 = inlined_call_operand.vmem [shape: f32[16,32], index: 1, kind: input, shape index: {}]
  %s2 = inlined_call_operand.vmem [shape: f32[1,32], index: 2, kind: input, shape index: {}]
  %s3 = inlined_call_operand.vmem [shape: bf16[128,32], index: 3, kind: output, shape index: {}]
  %s4 = sld [smem:[#allocation0]]
  $region22: #{tpu_custom_call.1} parent=0
    _
  %s6 = ssub.s32 1, %s4
  %s7 = scalar_select 0, %s6, %s4
  // Predicated region
  $region2: #{tpu_custom_call.1} parent=0 // pred_check
    _
  $region3: #{tpu_custom_call.1} parent=0 // pred_check_branch
    %9 = sbr.rel (0) target = $region5
  $region4: #{tpu_custom_call.1} parent=0 // pred_region
    _
  $region5: #{tpu_custom_call.1} parent=0 // pred_fallthru
    _
  // Predicated region
  $region6: #{tpu_custom_call.1} parent=0 // pred_check
    _
  $region7: #{tpu_custom_call.1} parent=0 // pred_check_branch
    %11 = sbr.rel (0) target = $region9
  $region8: #{tpu_custom_call.1} parent=0 // pred_region
    _
  $region9: #{tpu_custom_call.1} parent=0 // pred_fallthru
    _
  // Predicated region
  $region10: #{tpu_custom_call.1} parent=0 // pred_check
    _
  $region11: #{tpu_custom_call.1} parent=0 // pred_check_branch
    %13 = sbr.rel (0) target = $region13
  $region12: #{tpu_custom_call.1} parent=0 // pred_region
    _
  $region13: #{tpu_custom_call.1} parent=0 // pred_fallthru
    _
  %v14 = vld [vmem:[%s0] sm:$0xff]
  %v15 = vld [vmem:[%s0 + $0x8] sm:$0xff]
  %v16 = vld [vmem:[%s0 + $0x10] sm:$0xff]
  %v17 = vld [vmem:[%s0 + $0x18] sm:$0xff]
  %v18 = vld [vmem:[%s0 + $0x20] sm:$0xff]
  %v19 = vld [vmem:[%s0 + $0x28] sm:$0xff]
  %v20 = vld [vmem:[%s0 + $0x30] sm:$0xff]
  %v21 = vld [vmem:[%s0 + $0x38] sm:$0xff]
  %v22 = vld [vmem:[%s0 + $0x40] sm:$0xff]
  %v23 = vld [vmem:[%s0 + $0x48] sm:$0xff]
  %v24 = vld [vmem:[%s0 + $0x50] sm:$0xff]
  %v25 = vld [vmem:[%s0 + $0x58] sm:$0xff]
  %v26 = vld [vmem:[%s0 + $0x60] sm:$0xff]
  %v27 = vld [vmem:[%s0 + $0x68] sm:$0xff]
  %v28 = vld [vmem:[%s0 + $0x70] sm:$0xff]
  %v29 = vld [vmem:[%s0 + $0x78] sm:$0xff]
  %v30 = vld [vmem:[%s1] sm:$0xff]
  %v31 = vld [vmem:[%s1 + $0x8] sm:$0xff]
  %v32 = vld [vmem:[%s2] sm:$0x1]
  %v34 = vlaneseq
  %v35 = vshrl.u32 %v34, 7
  %v36 = vsub.s32 0, %v35
  %v37 = vrot.slane %v32, %v36
  %vm39 = vcmask 130048
  %v41 = vsel %vm39, %v14, 0
  %v44 = vsel %vm39, %v15, 0
  %v47 = vsel %vm39, %v16, 0
  %v50 = vsel %vm39, %v17, 0
  %v53 = vsel %vm39, %v18, 0
  %v56 = vsel %vm39, %v19, 0
  %v59 = vsel %vm39, %v20, 0
  %v62 = vsel %vm39, %v21, 0
  %v65 = vsel %vm39, %v22, 0
  %v68 = vsel %vm39, %v23, 0
  %v71 = vsel %vm39, %v24, 0
  %v74 = vsel %vm39, %v25, 0
  %v77 = vsel %vm39, %v26, 0
  %v80 = vsel %vm39, %v27, 0
  %v83 = vsel %vm39, %v28, 0
  %v86 = vsel %vm39, %v29, 0
  %88 = vmatprep.subr.mxu0 0.0
  %89 = vmatpush1.msra.mxu0 %v30
  %90 = vmatprep.subr.mxu0 0.0
  %91 = vmatpush1.msra.mxu0 %v31
  %92 = vmatprep.subr.mxu0 0.0
  %93 = vmatpush1.msra.mxu0 0.0
  %94 = vmatprep.subr.mxu0 0.0
  %95 = vmatpush1.msra.mxu0 0.0
  %96 = vmatprep.subr.mxu0 0.0
  %97 = vmatpush1.msra.mxu0 0.0
  %98 = vmatprep.subr.mxu0 0.0
  %99 = vmatpush1.msra.mxu0 0.0
  %100 = vmatprep.subr.mxu0 0.0
  %101 = vmatpush1.msra.mxu0 0.0
  %102 = vmatprep.subr.mxu0 0.0
  %103 = vmatpush1.msra.mxu0 0.0
  %104 = vmatprep.subr.mxu0 0.0
  %105 = vmatpush1.msra.mxu0 0.0
  %106 = vmatprep.subr.mxu0 0.0
  %107 = vmatpush1.msra.mxu0 0.0
  %108 = vmatprep.subr.mxu0 0.0
  %109 = vmatpush1.msra.mxu0 0.0
  %110 = vmatprep.subr.mxu0 0.0
  %111 = vmatpush1.msra.mxu0 0.0
  %112 = vmatprep.subr.mxu0 0.0
  %113 = vmatpush1.msra.mxu0 0.0
  %114 = vmatprep.subr.mxu0 0.0
  %115 = vmatpush1.msra.mxu0 0.0
  %116 = vmatprep.subr.mxu0 0.0
  %117 = vmatpush1.msra.mxu0 0.0
  %118 = vmatprep.subr.mxu0 0.0
  %119 = vmatpush1.msra.mxu0 0.0
  %120 = vmatprep.subr.mxu0 0.0
  %121 = vmatpush1.msra.mxu0 0.0
  %122 = vmatprep.subr.mxu0 0.0
  %123 = vmatpush1.msra.mxu0 0.0
  %124 = vmatprep.subr.mxu0 0.0
  %125 = vmatpush1.msra.mxu0 0.0
  %126 = vmatprep.subr.mxu0 0.0
  %127 = vmatpush1.msra.mxu0 0.0
  %128 = vmatprep.subr.mxu0 0.0
  %129 = vmatpush1.msra.mxu0 0.0
  %130 = vmatprep.subr.mxu0 0.0
  %131 = vmatpush1.msra.mxu0 0.0
  %132 = vmatprep.subr.mxu0 0.0
  %133 = vmatpush1.msra.mxu0 0.0
  %134 = vmatprep.subr.mxu0 0.0
  %135 = vmatpush1.msra.mxu0 0.0
  %136 = vmatprep.subr.mxu0 0.0
  %137 = vmatpush1.msra.mxu0 0.0
  %138 = vmatprep.subr.mxu0 0.0
  %139 = vmatpush1.msra.mxu0 0.0
  %140 = vmatprep.subr.mxu0 0.0
  %141 = vmatpush1.msra.mxu0 0.0
  %142 = vmatprep.subr.mxu0 0.0
  %143 = vmatpush1.msra.mxu0 0.0
  %144 = vmatprep.subr.mxu0 0.0
  %145 = vmatpush1.msra.mxu0 0.0
  %146 = vmatprep.subr.mxu0 0.0
  %147 = vmatpush1.msra.mxu0 0.0
  %148 = vmatprep.subr.mxu0 0.0
  %149 = vmatpush1.msra.mxu0 0.0
  %150 = vmatprep.subr.mxu0 0.0
  %151 = vmatpush1.msra.mxu0 0.0
  %152 = vmatprep.mubr.f32.mxu0 0.0
  %153 = vmatmul.mubr.f32.gmra.mrb[0].mxu0 %v41
  %v154 = vpop.f32.mrb[0].mxu0
  %v155 = vadd.f32 %v37, %v154
  %v156 = vpop.f32.mrb[0].mxu0
  %157 = vmatprep.mubr.f32.mxu0 0.0
  %158 = vmatmul.mubr.f32.gmra.mrb[0].mxu0 %v44
  %v159 = vpop.f32.mrb[0].mxu0
  %v160 = vadd.f32 %v37, %v159
  %v161 = vpop.f32.mrb[0].mxu0
  %162 = vmatprep.mubr.f32.mxu0 0.0
  %163 = vmatmul.mubr.f32.gmra.mrb[0].mxu0 %v47
  %v164 = vpop.f32.mrb[0].mxu0
  %v165 = vadd.f32 %v37, %v164
  %v166 = vpop.f32.mrb[0].mxu0
  %167 = vmatprep.mubr.f32.mxu0 0.0
  %168 = vmatmul.mubr.f32.gmra.mrb[0].mxu0 %v50
  %v169 = vpop.f32.mrb[0].mxu0
  %v170 = vadd.f32 %v37, %v169
  %v171 = vpop.f32.mrb[0].mxu0
  %172 = vmatprep.mubr.f32.mxu0 0.0
  %173 = vmatmul.mubr.f32.gmra.mrb[0].mxu0 %v53
  %v174 = vpop.f32.mrb[0].mxu0
  %v175 = vadd.f32 %v37, %v174
  %v176 = vpop.f32.mrb[0].mxu0
  %177 = vmatprep.mubr.f32.mxu0 0.0
  %178 = vmatmul.mubr.f32.gmra.mrb[0].mxu0 %v56
  %v179 = vpop.f32.mrb[0].mxu0
  %v180 = vadd.f32 %v37, %v179
  %v181 = vpop.f32.mrb[0].mxu0
  %182 = vmatprep.mubr.f32.mxu0 0.0
  %183 = vmatmul.mubr.f32.gmra.mrb[0].mxu0 %v59
  %v184 = vpop.f32.mrb[0].mxu0
  %v185 = vadd.f32 %v37, %v184
  %v186 = vpop.f32.mrb[0].mxu0
  %187 = vmatprep.mubr.f32.mxu0 0.0
  %188 = vmatmul.mubr.f32.gmra.mrb[0].mxu0 %v62
  %v189 = vpop.f32.mrb[0].mxu0
  %v190 = vadd.f32 %v37, %v189
  %v191 = vpop.f32.mrb[0].mxu0
  %192 = vmatprep.mubr.f32.mxu0 0.0
  %193 = vmatmul.mubr.f32.gmra.mrb[0].mxu0 %v65
  %v194 = vpop.f32.mrb[0].mxu0
  %v195 = vadd.f32 %v37, %v194
  %v196 = vpop.f32.mrb[0].mxu0
  %197 = vmatprep.mubr.f32.mxu0 0.0
  %198 = vmatmul.mubr.f32.gmra.mrb[0].mxu0 %v68
  %v199 = vpop.f32.mrb[0].mxu0
  %v200 = vadd.f32 %v37, %v199
  %v201 = vpop.f32.mrb[0].mxu0
  %202 = vmatprep.mubr.f32.mxu0 0.0
  %203 = vmatmul.mubr.f32.gmra.mrb[0].mxu0 %v71
  %v204 = vpop.f32.mrb[0].mxu0
  %v205 = vadd.f32 %v37, %v204
  %v206 = vpop.f32.mrb[0].mxu0
  %207 = vmatprep.mubr.f32.mxu0 0.0
  %208 = vmatmul.mubr.f32.gmra.mrb[0].mxu0 %v74
  %v209 = vpop.f32.mrb[0].mxu0
  %v210 = vadd.f32 %v37, %v209
  %v211 = vpop.f32.mrb[0].mxu0
  %212 = vmatprep.mubr.f32.mxu0 0.0
  %213 = vmatmul.mubr.f32.gmra.mrb[0].mxu0 %v77
  %v214 = vpop.f32.mrb[0].mxu0
  %v215 = vadd.f32 %v37, %v214
  %v216 = vpop.f32.mrb[0].mxu0
  %217 = vmatprep.mubr.f32.mxu0 0.0
  %218 = vmatmul.mubr.f32.gmra.mrb[0].mxu0 %v80
  %v219 = vpop.f32.mrb[0].mxu0
  %v220 = vadd.f32 %v37, %v219
  %v221 = vpop.f32.mrb[0].mxu0
  %222 = vmatprep.mubr.f32.mxu0 0.0
  %223 = vmatmul.mubr.f32.gmra.mrb[0].mxu0 %v83
  %v224 = vpop.f32.mrb[0].mxu0
  %v225 = vadd.f32 %v37, %v224
  %v226 = vpop.f32.mrb[0].mxu0
  %227 = vmatprep.mubr.f32.mxu0 0.0
  %228 = vmatmul.mubr.f32.gmra.mrb[0].mxu0 %v86
  %v229 = vpop.f32.mrb[0].mxu0
  %v230 = vadd.f32 %v37, %v229
  %v231 = vpop.f32.mrb[0].mxu0
  %232 = vdwg.mxu0
  %v233 = vmax.f32 %v155, 0.0
  %v234 = vmax.f32 %v160, 0.0
  %v235 = vmax.f32 %v165, 0.0
  %v236 = vmax.f32 %v170, 0.0
  %v237 = vmax.f32 %v175, 0.0
  %v238 = vmax.f32 %v180, 0.0
  %v239 = vmax.f32 %v185, 0.0
  %v240 = vmax.f32 %v190, 0.0
  %v241 = vmax.f32 %v195, 0.0
  %v242 = vmax.f32 %v200, 0.0
  %v243 = vmax.f32 %v205, 0.0
  %v244 = vmax.f32 %v210, 0.0
  %v245 = vmax.f32 %v215, 0.0
  %v246 = vmax.f32 %v220, 0.0
  %v247 = vmax.f32 %v225, 0.0
  %v248 = vmax.f32 %v230, 0.0
  %v249 = vpack.c.bf16 %v234, %v233
  %v250 = vpack.c.bf16 %v236, %v235
  %v251 = vpack.c.bf16 %v238, %v237
  %v252 = vpack.c.bf16 %v240, %v239
  %v253 = vpack.c.bf16 %v242, %v241
  %v254 = vpack.c.bf16 %v244, %v243
  %v255 = vpack.c.bf16 %v246, %v245
  %v256 = vpack.c.bf16 %v248, %v247
  %v265 = vunpack.c.l.b16 %v249
  %v266 = vunpack.c.h.b16 %v249
  %v267 = vunpack.c.l.b16 %v250
  %v268 = vunpack.c.h.b16 %v250
  %v269 = vunpack.c.l.b16 %v251
  %v270 = vunpack.c.h.b16 %v251
  %v271 = vunpack.c.l.b16 %v252
  %v272 = vunpack.c.h.b16 %v252
  %v273 = vunpack.c.l.b16 %v253
  %v274 = vunpack.c.h.b16 %v253
  %v275 = vunpack.c.l.b16 %v254
  %v276 = vunpack.c.h.b16 %v254
  %v277 = vunpack.c.l.b16 %v255
  %v278 = vunpack.c.h.b16 %v255
  %v279 = vunpack.c.l.b16 %v256
  %v280 = vunpack.c.h.b16 %v256
  %v281 = vpack.c.b16 %v265, %v265
  %v282 = vpack.c.b16 %v266, %v266
  %v283 = vpack.c.b16 %v267, %v267
  %v284 = vpack.c.b16 %v268, %v268
  %v285 = vpack.c.b16 %v269, %v269
  %v286 = vpack.c.b16 %v270, %v270
  %v287 = vpack.c.b16 %v271, %v271
  %v288 = vpack.c.b16 %v272, %v272
  %v289 = vpack.c.b16 %v273, %v273
  %v290 = vpack.c.b16 %v274, %v274
  %v291 = vpack.c.b16 %v275, %v275
  %v292 = vpack.c.b16 %v276, %v276
  %v293 = vpack.c.b16 %v277, %v277
  %v294 = vpack.c.b16 %v278, %v278
  %v295 = vpack.c.b16 %v279, %v279
  %v296 = vpack.c.b16 %v280, %v280
  %vm313 = vcmask 257024
  %314 = vst.msk [vmem:[%s3] sm:$0xf] %vm313, %v281
  %315 = vst.msk [vmem:[%s3 + $0x4] sm:$0xf] %vm313, %v282
  %316 = vst.msk [vmem:[%s3 + $0x8] sm:$0xf] %vm313, %v283
  %317 = vst.msk [vmem:[%s3 + $0xc] sm:$0xf] %vm313, %v284
  %318 = vst.msk [vmem:[%s3 + $0x10] sm:$0xf] %vm313, %v285
  %319 = vst.msk [vmem:[%s3 + $0x14] sm:$0xf] %vm313, %v286
  %320 = vst.msk [vmem:[%s3 + $0x18] sm:$0xf] %vm313, %v287
  %321 = vst.msk [vmem:[%s3 + $0x1c] sm:$0xf] %vm313, %v288
  %322 = vst.msk [vmem:[%s3 + $0x20] sm:$0xf] %vm313, %v289
  %323 = vst.msk [vmem:[%s3 + $0x24] sm:$0xf] %vm313, %v290
  %324 = vst.msk [vmem:[%s3 + $0x28] sm:$0xf] %vm313, %v291
  %325 = vst.msk [vmem:[%s3 + $0x2c] sm:$0xf] %vm313, %v292
  %326 = vst.msk [vmem:[%s3 + $0x30] sm:$0xf] %vm313, %v293
  %327 = vst.msk [vmem:[%s3 + $0x34] sm:$0xf] %vm313, %v294
  %328 = vst.msk [vmem:[%s3 + $0x38] sm:$0xf] %vm313, %v295
  %329 = vst.msk [vmem:[%s3 + $0x3c] sm:$0xf] %vm313, %v296
  // Predicated region
  $region14: #{tpu_custom_call.1} parent=0 // pred_check
    _
  $region15: #{tpu_custom_call.1} parent=0 // pred_check_branch
    %331 = sbr.rel (0) target = $region17
  $region16: #{tpu_custom_call.1} parent=0 // pred_region
    _
  $region17: #{tpu_custom_call.1} parent=0 // pred_fallthru
    _
  // Predicated region
  $region18: #{tpu_custom_call.1} parent=0 // pred_check
    _
  $region19: #{tpu_custom_call.1} parent=0 // pred_check_branch
    %333 = sbr.rel (0) target = $region21
  $region20: #{tpu_custom_call.1} parent=0 // pred_region
    _
  $region21: #{tpu_custom_call.1} parent=0 // pred_fallthru
    _

</llo_original>
